<compile_context>
chip_gen: v6e
topology: v6e:2x2x1
jax: 0.10.0
libtpu: 0.0.40
codegen_flags: <defaults>
</compile_context>

<pallas_src>
import jax
import jax.numpy as jnp
from jax.experimental import pallas as pl
from jax.experimental.pallas import tpu as pltpu


def _round_up(x, m):
    return (x + m - 1) // m * m


def _cbn_kernel(p_ref, w_ref, bias_ref, o_ref):
    """Fused im2col-matmul + folded-BN bias + HSwish for one row-band tile.

    p_ref:    (TILE_M, K)        bf16 im2col patches (M rows = output pixels)
    w_ref:    (K, Cout_pad)      bf16 conv weight with BN scale folded in
    bias_ref: (1, Cout_pad)      f32 folded BN bias = beta - mean * scale
    o_ref:    (TILE_M, Cout_pad) bf16 output tile
    """
    # One MXU matmul per tile, f32 accumulation.
    acc = jnp.dot(p_ref[...], w_ref[...], preferred_element_type=jnp.float32)
    # Bias add in f32, then the ~5-op HSwish (y * relu6(y + 3) / 6) in bf16.
    y = (acc + bias_ref[...]).astype(jnp.bfloat16)
    y = y * jnp.clip(y + 3.0, 0.0, 6.0) * (1.0 / 6.0)
    o_ref[...] = y.astype(o_ref.dtype)


def _choose_tile_m(M, K, Cout_pad, n_images):
    """VMEM-budgeted, bf16-packing-aligned M-tile with >= ~4 total grid steps."""
    budget = 24 * 1024 * 1024                      # conservative (v7x scoped default 32 MiB)
    const_bytes = K * Cout_pad * 2 + Cout_pad * 4  # resident bf16 weight + f32 bias
    per_row = 2 * K * 2 + 2 * Cout_pad * 2         # double-buffered bf16 patch + output rows
    fit = max(16, (budget - const_bytes) // per_row)
    # At least ~4 grid steps overall: keeps both v7x TensorCores busy even for
    # N == 1 and gives sequential v5e/v6e grids something to pipeline.
    tiles_per_image = max(1, (4 + n_images - 1) // n_images)
    step_cap = _round_up((M + tiles_per_image - 1) // tiles_per_image, 16)
    tile = min(512, fit, step_cap)
    return max(16, (tile // 16) * 16)


def cbn_forward(x_nchw, w_oihw, gamma, beta, running_mean, running_var,
                *, stride=1, padding=0, eps=1e-5):
    """Forward matching CBNModule(inchannel, outchannel, k, stride, padding, bias=False)."""
    N, Cin, H, W = x_nchw.shape
    Cout, _, KH, KW = w_oihw.shape

    # --- layout glue in plain JAX: NHWC (bf16 early), zero pad, im2col ---
    x = jnp.transpose(x_nchw, (0, 2, 3, 1)).astype(jnp.bfloat16)          # NHWC, bf16
    if padding:
        x = jnp.pad(x, ((0, 0), (padding, padding), (padding, padding), (0, 0)))
    Hp, Wp = x.shape[1], x.shape[2]
    Ho = (Hp - KH) // stride + 1
    Wo = (Wp - KW) // stride + 1

    # im2col: taps ordered (ky, kx, ci) to match the weight flattening below.
    cols = []
    for ky in range(KH):
        for kx in range(KW):
            cols.append(x[:, ky:ky + (Ho - 1) * stride + 1:stride,
                            kx:kx + (Wo - 1) * stride + 1:stride, :])
    K = KH * KW * Cin
    M = Ho * Wo
    patches = jnp.concatenate(cols, axis=-1).reshape(N, M, K)             # (N, M, K) bf16

    # Lane-dense output channels; VMEM-budgeted, 16-aligned M tiles.
    Cout_pad = _round_up(Cout, 128)
    TILE_M = _choose_tile_m(M, K, Cout_pad, N)
    M_pad = _round_up(M, TILE_M)
    if M_pad != M:
        patches = jnp.pad(patches, ((0, 0), (0, M_pad - M), (0, 0)))
    # Flatten (image, row-band) into one parallel grid axis; M_pad % TILE_M == 0
    # so tiles never straddle images.
    patches = patches.reshape(N * M_pad, K)

    # Fold BN (eval semantics) scale into the weight; only the bias survives
    # into the kernel epilogue. Padded channels get weight = bias = 0.
    inv_std = 1.0 / jnp.sqrt(running_var.astype(jnp.float32) + eps)
    scale = gamma.astype(jnp.float32) * inv_std                            # (Cout,)
    bias = beta.astype(jnp.float32) - running_mean.astype(jnp.float32) * scale
    w = jnp.transpose(w_oihw, (2, 3, 1, 0)).reshape(K, Cout).astype(jnp.float32)
    w = w * scale[None, :]
    w = jnp.pad(w, ((0, 0), (0, Cout_pad - Cout))).astype(jnp.bfloat16)    # (K, Cout_pad)
    bias = jnp.pad(bias, (0, Cout_pad - Cout)).reshape(1, Cout_pad)        # (1, Cout_pad) f32

    grid = (N * M_pad // TILE_M,)
    out = pl.pallas_call(
        _cbn_kernel,
        out_shape=jax.ShapeDtypeStruct((N * M_pad, Cout_pad), jnp.bfloat16),
        grid=grid,
        in_specs=[
            pl.BlockSpec((TILE_M, K), lambda m: (m, 0)),
            pl.BlockSpec((K, Cout_pad), lambda m: (0, 0)),
            pl.BlockSpec((1, Cout_pad), lambda m: (0, 0)),
        ],
        out_specs=pl.BlockSpec((TILE_M, Cout_pad), lambda m: (m, 0)),
        compiler_params=pltpu.CompilerParams(
            dimension_semantics=("parallel",),
            vmem_limit_bytes=32 * 1024 * 1024),
    )(patches, w, bias)

    out = out.reshape(N, M_pad, Cout_pad)[:, :M, :Cout]
    out = out.reshape(N, Ho, Wo, Cout).astype(jnp.float32)
    return jnp.transpose(out, (0, 3, 1, 2))                                # NCHW f32


def _reference(x_nchw, w_oihw, gamma, beta, mean, var, eps=1e-5):
    """Pure-JAX reference (conv + eval-mode BN + HSwish), NCHW, f32."""
    y = jax.lax.conv_general_dilated(
        x_nchw.astype(jnp.float32), w_oihw.astype(jnp.float32),
        window_strides=(1, 1), padding="VALID",
        dimension_numbers=("NCHW", "OIHW", "NCHW"))
    inv_std = 1.0 / jnp.sqrt(var + eps)
    s = (gamma * inv_std).reshape(1, -1, 1, 1)
    b = (beta - mean * gamma * inv_std).reshape(1, -1, 1, 1)
    y = y * s + b
    return y * jnp.clip(y + 3.0, 0.0, 6.0) / 6.0


if __name__ == "__main__":
    # CBNModule(inchannel=4, outchannel=24, kernel_size=3, stride=1, padding=0)
    N, Cin, H, W = 2, 4, 16, 16
    Cout, KH, KW = 24, 3, 3

    key = jax.random.PRNGKey(0)
    kx, kw, kg, kb, km, kv = jax.random.split(key, 6)

    x = jax.random.normal(kx, (N, Cin, H, W), dtype=jnp.float32)
    conv_w = 0.1 * jax.random.normal(kw, (Cout, Cin, KH, KW), dtype=jnp.float32)
    gamma = jax.random.uniform(kg, (Cout,), minval=0.5, maxval=1.5, dtype=jnp.float32)
    beta = 0.1 * jax.random.normal(kb, (Cout,), dtype=jnp.float32)
    running_mean = 0.1 * jax.random.normal(km, (Cout,), dtype=jnp.float32)
    running_var = jax.random.uniform(kv, (Cout,), minval=0.5, maxval=1.5, dtype=jnp.float32)

    out = cbn_forward(x, conv_w, gamma, beta, running_mean, running_var,
                      stride=1, padding=0)
    out = jax.block_until_ready(out)

    ref = _reference(x, conv_w, gamma, beta, running_mean, running_var)
    assert out.shape == (N, Cout, H - KH + 1, W - KW + 1), out.shape
    # Tolerance sized for bf16 matmul operands + bf16 HSwish/store.
    assert jnp.allclose(out, ref, atol=3e-2, rtol=3e-2), float(jnp.max(jnp.abs(out - ref)))

    print("KERNEL_OK")
</pallas_src>

<mosaic_0001>
module attributes {stable_mosaic.version = 11 : i64} {
  func.func @_cbn_kernel(%arg0: i32, %arg1: memref<112x36xbf16, #tpu.memory_space<vmem>>, %arg2: memref<36x128xbf16, #tpu.memory_space<vmem>>, %arg3: memref<1x128xf32, #tpu.memory_space<vmem>>, %arg4: memref<112x128xbf16, #tpu.memory_space<vmem>>) attributes {dimension_semantics = [#tpu.dimension_semantics<parallel>], iteration_bounds = array<i64: 4>, scalar_prefetch = 0 : i64, scratch_operands = 0 : i64, tpu.core_type = #tpu.core_type<tc>, window_params = [{transform_indices = @transform_0, window_bounds = array<i64: 112, 36>}, {pipeline_mode = #tpu.pipeline_mode<synchronous>, transform_indices = @transform_1, window_bounds = array<i64: 36, 128>}, {pipeline_mode = #tpu.pipeline_mode<synchronous>, transform_indices = @transform_2, window_bounds = array<i64: 1, 128>}, {transform_indices = @transform_3, window_bounds = array<i64: 112, 128>}]} {
    %c0 = arith.constant 0 : index
    %c0_0 = arith.constant 0 : index
    %0 = vector.load %arg1[%c0, %c0_0] : memref<112x36xbf16, #tpu.memory_space<vmem>>, vector<112x36xbf16>
    %c0_1 = arith.constant 0 : index
    %c0_2 = arith.constant 0 : index
    %1 = vector.load %arg2[%c0_1, %c0_2] : memref<36x128xbf16, #tpu.memory_space<vmem>>, vector<36x128xbf16>
    %cst = arith.constant dense<0.000000e+00> : vector<112x128xf32>
    %2 = tpu.matmul %0, %1, %cst {dimension_numbers = #tpu.dot_dimension_numbers<[1], [0], [0], [1], [0, 0, 1, 1], [], []>} : vector<112x36xbf16>, vector<36x128xbf16>, vector<112x128xf32> -> vector<112x128xf32>
    %c0_3 = arith.constant 0 : index
    %c0_4 = arith.constant 0 : index
    %3 = vector.load %arg3[%c0_3, %c0_4] : memref<1x128xf32, #tpu.memory_space<vmem>>, vector<1x128xf32>
    %4 = vector.broadcast %3 : vector<1x128xf32> to vector<112x128xf32>
    %5 = arith.addf %2, %4 : vector<112x128xf32>
    %6 = arith.truncf %5 : vector<112x128xf32> to vector<112x128xbf16>
    %cst_5 = arith.constant 3.000000e+00 : bf16
    %7 = vector.broadcast %cst_5 : bf16 to vector<112x128xbf16>
    %8 = arith.addf %6, %7 : vector<112x128xbf16>
    %cst_6 = arith.constant 0.000000e+00 : f32
    %cst_7 = arith.constant 6.000000e+00 : f32
    %9 = arith.truncf %cst_6 : f32 to bf16
    %10 = vector.broadcast %9 : bf16 to vector<112x128xbf16>
    %11 = arith.maximumf %10, %8 : vector<112x128xbf16>
    %12 = arith.truncf %cst_7 : f32 to bf16
    %13 = vector.broadcast %12 : bf16 to vector<112x128xbf16>
    %14 = arith.minimumf %13, %11 : vector<112x128xbf16>
    %15 = arith.mulf %6, %14 : vector<112x128xbf16>
    %cst_8 = arith.constant 1.669920e-01 : bf16
    %16 = vector.broadcast %cst_8 : bf16 to vector<112x128xbf16>
    %17 = arith.mulf %15, %16 : vector<112x128xbf16>
    %c0_9 = arith.constant 0 : index
    %c0_10 = arith.constant 0 : index
    %18 = vector.load %arg4[%c0_9, %c0_10] : memref<112x128xbf16, #tpu.memory_space<vmem>>, vector<112x128xbf16>
    tpu.vector_store %arg4[%c0_9, %c0_10], %17 {strides = array<i32>} : memref<112x128xbf16, #tpu.memory_space<vmem>>, vector<112x128xbf16>,
    return
  }
  func.func @transform_0(%arg0: i32) -> (i32, i32) {
    %c0_i32 = arith.constant 0 : i32
    %c0_i32_0 = arith.constant 0 : i32
    return %arg0, %c0_i32 : i32, i32
  }
  func.func @transform_1(%arg0: i32) -> (i32, i32) {
    %c0_i32 = arith.constant 0 : i32
    %c0_i32_0 = arith.constant 0 : i32
    %c0_i32_1 = arith.constant 0 : i32
    return %c0_i32, %c0_i32_0 : i32, i32
  }
  func.func @transform_2(%arg0: i32) -> (i32, i32) {
    %c0_i32 = arith.constant 0 : i32
    %c0_i32_0 = arith.constant 0 : i32
    %c0_i32_1 = arith.constant 0 : i32
    return %c0_i32, %c0_i32_0 : i32, i32
  }
  func.func @transform_3(%arg0: i32) -> (i32, i32) {
    %c0_i32 = arith.constant 0 : i32
    %c0_i32_0 = arith.constant 0 : i32
    return %arg0, %c0_i32 : i32, i32
  }
}

</mosaic_0001>

<llo_original>
// kernel: tpu_custom_call.1
$region0: #{tpu_custom_call.1}
  #allocation0 [shape = 'u32[]', space=smem, size = 0x4, offset = 0x4, fixed_abs, tag = 'smem constant byte address 0x4 - core index']
  #allocation1 [shape = 'u32[144,128]{1,0:T(1,128)}', space=vmem, size = 0x12000, scoped, tag = 'internal scratch']
  %s0 = inlined_call_operand.vmem [shape: bf16[448,36], index: 0, kind: input, shape index: {}]
  %s1 = inlined_call_operand.vmem [shape: bf16[36,128], index: 1, kind: input, shape index: {}]
  %s2 = inlined_call_operand.vmem [shape: f32[1,128], index: 2, kind: input, shape index: {}]
  %s3 = inlined_call_operand.hbm [shape: bf16[448,128], index: 3, kind: output, shape index: {}]
  %s4 = sld [smem:[#allocation0]]
  $region45: #{tpu_custom_call.1} parent=0
    _
  %s6 = ssub.s32 1, %s4
  %s7 = scalar_select 0, %s6, %s4
  $region1: #{tpu_custom_call.1} parent=0
    #allocation2 [shape = 'u8[57344]{0}', space=vmem, size = 0xe000, scoped, tag = 'output window, operand 0']
    #allocation3 [shape = 's32[2]{0}', space=sflag, size = 0x8, scoped, tag = 'scoped memory for tpu_custom_call.1']
    %8 = vsyncpa [#allocation3], 0
    %s9 = scalar_lea.sflag [#allocation3], 1
    %10 = vsyncpa %s9, 0
    loop: start=0, step=1, limit=6
    $region2: #{tpu_custom_call.1} parent=1 // loop_pre_header
      _
    $region3: #{tpu_custom_call.1} parent=1 // loop_header
      %s12 = sphi 0, %s16
      %p13 = scmp.ge.s32.totalorder %s12, 6
      %s22 = sphi 0, %s24
      %s25 = sphi 0, %s22
      %s26 = sphi 0, %s25
      %s42 = sphi 0, %s26
      %s46 = sphi 0, %s46
      %s48 = sphi 0, %s46
      %s49 = sphi 0, %s48
      %s63 = sphi 0, %s49
      %s67 = sphi 0, %s67
      %s69 = sphi 0, %s67
      %s70 = sphi 0, %s69
      %s84 = sphi 0, %s70
      %s90 = sphi 0, %s92
      %s93 = sphi 0, %s90
      %s94 = sphi 0, %s93
      %s110 = sphi 0, %s94
    $region4: #{tpu_custom_call.1} parent=1 // loop_header_branch
      %15 = sbr.rel (%p13) target = $region8
    $region5: #{tpu_custom_call.1} parent=1 // loop_body
      %s17 = ssub.s32 %s12, 1
      %s18 = ssub.s32 %s12, 2
      %s19 = sadd.s32 %s12, 1
      %s20 = ssub.s32 %s12, %s19
      %p21 = scmp.eq.s32.totalorder %s20, 0
      %s23 = sadd.s32 %s22, 1
      %s24 = scalar_select %p21, %s22, %s23
      %p27 = pneg %p21
      %p28 = scmp.eq.s32.totalorder %s12, 3
      %p29 = por %p27, %p28
      %p30 = scmp.ne.s32.totalorder %s22, %s25
      %p31 = scmp.eq.s32.totalorder %s12, 0
      %p32 = por %p30, %p31
      %p33 = scmp.ne.s32.totalorder %s22, %s25
      %p34 = scmp.eq.s32.totalorder %s17, 3
      %p35 = por %p33, %p34
      %p36 = scmp.ne.s32.totalorder %s25, %s26
      %p37 = scmp.eq.s32.totalorder %s17, 0
      %p38 = por %p36, %p37
      %p39 = scmp.ne.s32.totalorder %s25, %s26
      %p40 = scmp.eq.s32.totalorder %s18, 3
      %p41 = por %p39, %p40
      %p43 = scmp.ne.s32.totalorder %s26, %s42
      %p44 = scmp.eq.s32.totalorder %s18, 0
      %p45 = por %p43, %p44
      %s47 = sadd.s32 %s46, 1
      %p50 = scmp.eq.s32.totalorder %s12, 3
      %p51 = scmp.ne.s32.totalorder %s46, %s48
      %p52 = scmp.eq.s32.totalorder %s12, 0
      %p53 = por %p51, %p52
      %p54 = scmp.ne.s32.totalorder %s46, %s48
      %p55 = scmp.eq.s32.totalorder %s17, 3
      %p56 = por %p54, %p55
      %p57 = scmp.ne.s32.totalorder %s48, %s49
      %p58 = scmp.eq.s32.totalorder %s17, 0
      %p59 = por %p57, %p58
      %p60 = scmp.ne.s32.totalorder %s48, %s49
      %p61 = scmp.eq.s32.totalorder %s18, 3
      %p62 = por %p60, %p61
      %p64 = scmp.ne.s32.totalorder %s49, %s63
      %p65 = scmp.eq.s32.totalorder %s18, 0
      %p66 = por %p64, %p65
      %s68 = sadd.s32 %s67, 1
      %p71 = scmp.eq.s32.totalorder %s12, 3
      %p72 = scmp.ne.s32.totalorder %s67, %s69
      %p73 = scmp.eq.s32.totalorder %s12, 0
      %p74 = por %p72, %p73
      %p75 = scmp.ne.s32.totalorder %s67, %s69
      %p76 = scmp.eq.s32.totalorder %s17, 3
      %p77 = por %p75, %p76
      %p78 = scmp.ne.s32.totalorder %s69, %s70
      %p79 = scmp.eq.s32.totalorder %s17, 0
      %p80 = por %p78, %p79
      %p81 = scmp.ne.s32.totalorder %s69, %s70
      %p82 = scmp.eq.s32.totalorder %s18, 3
      %p83 = por %p81, %p82
      %p85 = scmp.ne.s32.totalorder %s70, %s84
      %p86 = scmp.eq.s32.totalorder %s18, 0
      %p87 = por %p85, %p86
      %s88 = ssub.s32 %s12, %s19
      %p89 = scmp.eq.s32.totalorder %s88, 0
      %s91 = sadd.s32 %s90, 1
      %s92 = scalar_select %p89, %s90, %s91
      %p95 = pneg %p89
      %p96 = scmp.eq.s32.totalorder %s12, 3
      %p97 = por %p95, %p96
      %p98 = scmp.ne.s32.totalorder %s90, %s93
      %p99 = scmp.eq.s32.totalorder %s12, 0
      %p100 = por %p98, %p99
      %p101 = scmp.ne.s32.totalorder %s90, %s93
      %p102 = scmp.eq.s32.totalorder %s17, 3
      %p103 = por %p101, %p102
      %p104 = scmp.ne.s32.totalorder %s93, %s94
      %p105 = scmp.eq.s32.totalorder %s17, 0
      %p106 = por %p104, %p105
      %p107 = scmp.ne.s32.totalorder %s93, %s94
      %p108 = scmp.eq.s32.totalorder %s18, 3
      %p109 = por %p107, %p108
      %p111 = scmp.ne.s32.totalorder %s94, %s110
      %p112 = scmp.eq.s32.totalorder %s18, 0
      %p113 = por %p111, %p112
      %p114 = scmp.le.s32.totalorder 1, %s12
      %p115 = scmp.lt.s32.totalorder %s12, 5
      %p116 = pnand %p114, %p115
      %p117 = pneg %p116
      // Predicated region
      $region9: #{tpu_custom_call.1} parent=5 // pred_check
        _
      $region10: #{tpu_custom_call.1} parent=5 // pred_check_branch
        %119 = sbr.rel (%p116) target = $region12
      $region11: #{tpu_custom_call.1} parent=5 // pred_region
        %s120 = ssub.s32 %s12, 1
        // Predicated region
        $region13: #{tpu_custom_call.1} parent=11 // pred_check
          %p121 = pneg %p59
        $region14: #{tpu_custom_call.1} parent=11 // pred_check_branch
          %123 = sbr.rel (%p121) target = $region16
        $region15: #{tpu_custom_call.1} parent=11 // pred_region
          _
        $region16: #{tpu_custom_call.1} parent=11 // pred_fallthru
          _
        // Predicated region
        $region17: #{tpu_custom_call.1} parent=11 // pred_check
          %p124 = pneg %p80
        $region18: #{tpu_custom_call.1} parent=11 // pred_check_branch
          %126 = sbr.rel (%p124) target = $region20
        $region19: #{tpu_custom_call.1} parent=11 // pred_region
          _
        $region20: #{tpu_custom_call.1} parent=11 // pred_fallthru
          _
      $region12: #{tpu_custom_call.1} parent=5 // pred_fallthru
        _
      %p127 = scmp.lt.s32.totalorder %s12, 4
      // Predicated region
      $region21: #{tpu_custom_call.1} parent=5 // pred_check
        %p128 = pneg %p127
      $region22: #{tpu_custom_call.1} parent=5 // pred_check_branch
        %130 = sbr.rel (%p128) target = $region24
      $region23: #{tpu_custom_call.1} parent=5 // pred_region
        // Predicated region
        $region25: #{tpu_custom_call.1} parent=23 // pred_check
          %p131 = pneg %p32
        $region26: #{tpu_custom_call.1} parent=23 // pred_check_branch
          %133 = sbr.rel (%p131) target = $region28
        $region27: #{tpu_custom_call.1} parent=23 // pred_region
          %s134 = smul.u32 14, %s12
          %p135 = scmp.lt.s32.totalorder %s134, 55
          %s136 = scalar_select %p135, %s134, 55
          %s137 = smul.addr %s136, 4
          %s138 = scalar_lea.vmem %s0, %s137
          %s139 = smul.u32 14, %s12
        $region28: #{tpu_custom_call.1} parent=23 // pred_fallthru
          _
      $region24: #{tpu_custom_call.1} parent=5 // pred_fallthru
        _
      %p140 = scmp.le.s32.totalorder 1, %s12
      %p141 = scmp.lt.s32.totalorder %s12, 5
      %p142 = pnand %p140, %p141
      %p143 = pneg %p142
      // Predicated region
      $region29: #{tpu_custom_call.1} parent=5 // pred_check
        _
      $region30: #{tpu_custom_call.1} parent=5 // pred_check_branch
        %145 = sbr.rel (%p142) target = $region32
      $region31: #{tpu_custom_call.1} parent=5 // pred_region
        %s146 = ssub.s32 %s12, 1
        %s147 = smul.u32 14, %s17
        %p148 = scmp.lt.s32.totalorder %s147, 55
        %s149 = scalar_select %p148, %s147, 55
        %s150 = smul.addr %s149, 4
        %s151 = scalar_lea.vmem %s0, %s150
        %p152 = pneg %p38
        %p153 = pneg %p35
        %p154 = pneg %p59
        %p155 = pneg %p56
        %p156 = pneg %p80
        %p157 = pneg %p77
        %p158 = pneg %p106
        %p159 = pneg %p103
        %s160 = sand.u32 %s93, 1
        %s161 = scalar_lea.sflag [#allocation3], %s160
        %s162 = sand.u32 %s93, 1
        %s163 = smul.addr %s162, 56
        %s164 = scalar_lea.vmem [#allocation2], %s163
        %s165 = smul.u32 14, %s17
        %p166 = scmp.lt.s32.totalorder %s165, 55
        %s167 = scalar_select %p166, %s165, 55
        %s168 = smul.addr %s167, 4
        %s169 = scalar_lea.vmem %s0, %s168
        %s170 = smul.u32 14, %s17
        %s171 = smul.u32 14, %s17
        %v176 = vld [vmem:[%s169] sm:$0xf]
        %v177 = vld [vmem:[%s169 + $0x4] sm:$0xf]
        %v178 = vld [vmem:[%s169 + $0x8] sm:$0xf]
        %v179 = vld [vmem:[%s169 + $0xc] sm:$0xf]
        %v180 = vld [vmem:[%s169 + $0x10] sm:$0xf]
        %v181 = vld [vmem:[%s169 + $0x14] sm:$0xf]
        %v182 = vld [vmem:[%s169 + $0x18] sm:$0xf]
        %v183 = vld [vmem:[%s169 + $0x1c] sm:$0xf]
        %v184 = vld [vmem:[%s169 + $0x20] sm:$0xf]
        %v185 = vld [vmem:[%s169 + $0x24] sm:$0xf]
        %v186 = vld [vmem:[%s169 + $0x28] sm:$0xf]
        %v187 = vld [vmem:[%s169 + $0x2c] sm:$0xf]
        %v188 = vld [vmem:[%s169 + $0x30] sm:$0xf]
        %v189 = vld [vmem:[%s169 + $0x34] sm:$0xf]
        %v190 = vld [vmem:[%s1] sm:$0xf]
        %v191 = vld [vmem:[%s1 + $0x4] sm:$0xf]
        %v192 = vld [vmem:[%s1 + $0x8] sm:$0xf]
        %v193 = vld [vmem:[%s1 + $0xc] sm:$0xf]
        %v194 = vld [vmem:[%s1 + $0x10] sm:$0x3]
        %v195 = vld [vmem:[%s2] sm:$0x1]
        %v197 = vlaneseq
        %v198 = vshrl.u32 %v197, 7
        %v199 = vsub.s32 0, %v198
        %v200 = vrot.slane %v195, %v199
        %v216 = vunpack.c.l.b16 %v176
        %v217 = vunpack.c.l.b16 %v177
        %v218 = vunpack.c.l.b16 %v178
        %v219 = vunpack.c.l.b16 %v179
        %v220 = vunpack.c.l.b16 %v180
        %v221 = vunpack.c.l.b16 %v181
        %v222 = vunpack.c.l.b16 %v182
        %v223 = vunpack.c.l.b16 %v183
        %v224 = vunpack.c.l.b16 %v184
        %v225 = vunpack.c.l.b16 %v185
        %v226 = vunpack.c.l.b16 %v186
        %v227 = vunpack.c.l.b16 %v187
        %v228 = vunpack.c.l.b16 %v188
        %v229 = vunpack.c.l.b16 %v189
        %v230 = vpack.c.b16 %v217, %v216
        %v231 = vpack.c.b16 %v219, %v218
        %v232 = vpack.c.b16 %v221, %v220
        %v233 = vpack.c.b16 %v223, %v222
        %v234 = vpack.c.b16 %v225, %v224
        %v235 = vpack.c.b16 %v227, %v226
        %v236 = vpack.c.b16 %v229, %v228
        %v242 = vunpack.c.l.b16 %v190
        %v243 = vunpack.c.l.b16 %v191
        %v244 = vunpack.c.l.b16 %v192
        %v245 = vunpack.c.l.b16 %v193
        %v246 = vunpack.c.l.b16 %v194
        %v247 = vpack.c.b16 %v243, %v242
        %v248 = vpack.c.b16 %v245, %v244
        %v249 = vpack.c.b16 %v246, %v246
        %vm252 = vcmask 293888
        %v254 = vsel %vm252, %v230, 0
        %v257 = vsel %vm252, %v231, 0
        %v260 = vsel %vm252, %v232, 0
        %v263 = vsel %vm252, %v233, 0
        %v266 = vsel %vm252, %v234, 0
        %v269 = vsel %vm252, %v235, 0
        %v272 = vsel %vm252, %v236, 0
        %vm274 = vcmask 1041408
        %v276 = vsel %vm274, %v249, 0
        %278 = vmatprep.subr.bf16.mxu0 0
        %279 = vmatpush1.bf16.msra.mxu0 0
        %280 = vmatprep.subr.bf16.mxu0 0
        %281 = vmatpush1.bf16.msra.mxu0 0
        %282 = vmatprep.subr.bf16.mxu0 0
        %283 = vmatpush1.bf16.msra.mxu0 0
        %284 = vmatprep.subr.bf16.mxu0 0
        %285 = vmatpush1.bf16.msra.mxu0 0
        %286 = vmatprep.subr.bf16.mxu0 0
        %287 = vmatpush1.bf16.msra.mxu0 0
        %288 = vmatprep.subr.bf16.mxu0 0
        %289 = vmatpush1.bf16.msra.mxu0 %v276
        %290 = vmatprep.subr.bf16.mxu0 0
        %291 = vmatpush1.bf16.msra.mxu0 %v248
        %292 = vmatprep.subr.bf16.mxu0 0
        %293 = vmatpush1.bf16.msra.mxu0 %v247
        %294 = vmatprep.subr.bf16.mxu0 0
        %295 = vmatpush2.bf16.msra.mxu0 0
        %296 = vmatprep.subr.bf16.mxu0 0
        %297 = vmatpush2.bf16.msra.mxu0 0
        %298 = vmatprep.subr.bf16.mxu0 0
        %299 = vmatpush2.bf16.msra.mxu0 0
        %300 = vmatprep.subr.bf16.mxu0 0
        %301 = vmatpush2.bf16.msra.mxu0 0
        %302 = vmatprep.subr.bf16.mxu0 0
        %303 = vmatpush2.bf16.msra.mxu0 0
        %304 = vmatprep.subr.bf16.mxu0 0
        %305 = vmatpush2.bf16.msra.mxu0 0
        %306 = vmatprep.subr.bf16.mxu0 0
        %307 = vmatpush2.bf16.msra.mxu0 0
        %308 = vmatprep.subr.bf16.mxu0 0
        %309 = vmatpush2.bf16.msra.mxu0 0
        %310 = vmatprep.mubr.bf16.mxu0 0
        %311 = vmatmul.mubr.bf16.gmra.mxu0 %v254
        %v312 = vpop.f32.mrf.mxu0
        %v313 = vadd.f32 %v200, %v312
        %v314 = vpop.f32.mrf.mxu0
        %v315 = vpop.f32.mrf.mxu0
        %v316 = vadd.f32 %v200, %v315
        %v317 = vpop.f32.mrf.mxu0
        %318 = vmatprep.mubr.bf16.mxu0 0
        %319 = vmatmul.mubr.bf16.gmra.mxu0 %v257
        %v320 = vpop.f32.mrf.mxu0
        %v321 = vadd.f32 %v200, %v320
        %v322 = vpop.f32.mrf.mxu0
        %v323 = vpop.f32.mrf.mxu0
        %v324 = vadd.f32 %v200, %v323
        %v325 = vpop.f32.mrf.mxu0
        %326 = vmatprep.mubr.bf16.mxu0 0
        %327 = vmatmul.mubr.bf16.gmra.mxu0 %v260
        %v328 = vpop.f32.mrf.mxu0
        %v329 = vadd.f32 %v200, %v328
        %v330 = vpop.f32.mrf.mxu0
        %v331 = vpop.f32.mrf.mxu0
        %v332 = vadd.f32 %v200, %v331
        %v333 = vpop.f32.mrf.mxu0
        %334 = vmatprep.mubr.bf16.mxu0 0
        %335 = vmatmul.mubr.bf16.gmra.mxu0 %v263
        %v336 = vpop.f32.mrf.mxu0
        %v337 = vadd.f32 %v200, %v336
        %v338 = vpop.f32.mrf.mxu0
        %v339 = vpop.f32.mrf.mxu0
        %v340 = vadd.f32 %v200, %v339
        %v341 = vpop.f32.mrf.mxu0
        %342 = vmatprep.mubr.bf16.mxu0 0
        %343 = vmatmul.mubr.bf16.gmra.mxu0 %v266
        %v344 = vpop.f32.mrf.mxu0
        %v345 = vadd.f32 %v200, %v344
        %v346 = vpop.f32.mrf.mxu0
        %v347 = vpop.f32.mrf.mxu0
        %v348 = vadd.f32 %v200, %v347
        %v349 = vpop.f32.mrf.mxu0
        %350 = vmatprep.mubr.bf16.mxu0 0
        %351 = vmatmul.mubr.bf16.gmra.mxu0 %v269
        %v352 = vpop.f32.mrf.mxu0
        %v353 = vadd.f32 %v200, %v352
        %v354 = vpop.f32.mrf.mxu0
        %v355 = vpop.f32.mrf.mxu0
        %v356 = vadd.f32 %v200, %v355
        %v357 = vpop.f32.mrf.mxu0
        %358 = vmatprep.mubr.bf16.mxu0 0
        %359 = vmatmul.mubr.bf16.gmra.mxu0 %v272
        %v360 = vpop.f32.mrf.mxu0
        %v361 = vadd.f32 %v200, %v360
        %v362 = vpop.f32.mrf.mxu0
        %v363 = vpop.f32.mrf.mxu0
        %v364 = vadd.f32 %v200, %v363
        %v365 = vpop.f32.mrf.mxu0
        %366 = vdwg.mxu0
        %v367 = vpack.c.bf16 %v316, %v313
        %v368 = vpack.c.bf16 %v324, %v321
        %v369 = vpack.c.bf16 %v332, %v329
        %v370 = vpack.c.bf16 %v340, %v337
        %v371 = vpack.c.bf16 %v348, %v345
        %v372 = vpack.c.bf16 %v356, %v353
        %v373 = vpack.c.bf16 %v364, %v361
        %v374 = vadd.bf16 %v367, 1077952576
        %v375 = vadd.bf16 %v368, 1077952576
        %v376 = vadd.bf16 %v369, 1077952576
        %v377 = vadd.bf16 %v370, 1077952576
        %v378 = vadd.bf16 %v371, 1077952576
        %v379 = vadd.bf16 %v372, 1077952576
        %v380 = vadd.bf16 %v373, 1077952576
        %v381 = vmax.bf16 %v374, 0
        %v382 = vmax.bf16 %v375, 0
        %v383 = vmax.bf16 %v376, 0
        %v384 = vmax.bf16 %v377, 0
        %v385 = vmax.bf16 %v378, 0
        %v386 = vmax.bf16 %v379, 0
        %v387 = vmax.bf16 %v380, 0
        %v388 = vmin.bf16 %v381, 1086341312
        %v389 = vmin.bf16 %v382, 1086341312
        %v390 = vmin.bf16 %v383, 1086341312
        %v391 = vmin.bf16 %v384, 1086341312
        %v392 = vmin.bf16 %v385, 1086341312
        %v393 = vmin.bf16 %v386, 1086341312
        %v394 = vmin.bf16 %v387, 1086341312
        %v395 = vmul.bf16 %v367, %v388
        %v396 = vmul.bf16 %v368, %v389
        %v397 = vmul.bf16 %v369, %v390
        %v398 = vmul.bf16 %v370, %v391
        %v399 = vmul.bf16 %v371, %v392
        %v400 = vmul.bf16 %v372, %v393
        %v401 = vmul.bf16 %v373, %v394
        %v402 = vmul.bf16 %v395, 1043021355
        %v403 = vmul.bf16 %v396, 1043021355
        %v404 = vmul.bf16 %v397, 1043021355
        %v405 = vmul.bf16 %v398, 1043021355
        %v406 = vmul.bf16 %v399, 1043021355
        %v407 = vmul.bf16 %v400, 1043021355
        %v408 = vmul.bf16 %v401, 1043021355
        %v416 = vunpack.c.l.b16 %v402
        %v417 = vunpack.c.h.b16 %v402
        %v418 = vunpack.c.l.b16 %v403
        %v419 = vunpack.c.h.b16 %v403
        %v420 = vunpack.c.l.b16 %v404
        %v421 = vunpack.c.h.b16 %v404
        %v422 = vunpack.c.l.b16 %v405
        %v423 = vunpack.c.h.b16 %v405
        %v424 = vunpack.c.l.b16 %v406
        %v425 = vunpack.c.h.b16 %v406
        %v426 = vunpack.c.l.b16 %v407
        %v427 = vunpack.c.h.b16 %v407
        %v428 = vunpack.c.l.b16 %v408
        %v429 = vunpack.c.h.b16 %v408
        %v430 = vpack.c.b16 %v416, %v416
        %v431 = vpack.c.b16 %v417, %v417
        %v432 = vpack.c.b16 %v418, %v418
        %v433 = vpack.c.b16 %v419, %v419
        %v434 = vpack.c.b16 %v420, %v420
        %v435 = vpack.c.b16 %v421, %v421
        %v436 = vpack.c.b16 %v422, %v422
        %v437 = vpack.c.b16 %v423, %v423
        %v438 = vpack.c.b16 %v424, %v424
        %v439 = vpack.c.b16 %v425, %v425
        %v440 = vpack.c.b16 %v426, %v426
        %v441 = vpack.c.b16 %v427, %v427
        %v442 = vpack.c.b16 %v428, %v428
        %v443 = vpack.c.b16 %v429, %v429
        %458 = vst [vmem:[%s164] sm:$0xf] %v430
        %459 = vst [vmem:[%s164 + $0x4] sm:$0xf] %v431
        %460 = vst [vmem:[%s164 + $0x8] sm:$0xf] %v432
        %461 = vst [vmem:[%s164 + $0xc] sm:$0xf] %v433
        %462 = vst [vmem:[%s164 + $0x10] sm:$0xf] %v434
        %463 = vst [vmem:[%s164 + $0x14] sm:$0xf] %v435
        %464 = vst [vmem:[%s164 + $0x18] sm:$0xf] %v436
        %465 = vst [vmem:[%s164 + $0x1c] sm:$0xf] %v437
        %466 = vst [vmem:[%s164 + $0x20] sm:$0xf] %v438
        %467 = vst [vmem:[%s164 + $0x24] sm:$0xf] %v439
        %468 = vst [vmem:[%s164 + $0x28] sm:$0xf] %v440
        %469 = vst [vmem:[%s164 + $0x2c] sm:$0xf] %v441
        %470 = vst [vmem:[%s164 + $0x30] sm:$0xf] %v442
        %471 = vst [vmem:[%s164 + $0x34] sm:$0xf] %v443
        %s472 = sand.u32 %s93, 1
        %s473 = scalar_lea.sflag [#allocation3], %s472
        %s474 = sand.u32 %s93, 1
        %s475 = smul.addr %s474, 56
        %s476 = scalar_lea.vmem [#allocation2], %s475
        // Predicated region
        $region33: #{tpu_custom_call.1} parent=31 // pred_check
          %p477 = pneg %p103
        $region34: #{tpu_custom_call.1} parent=31 // pred_check_branch
          %479 = sbr.rel (%p477) target = $region36
        $region35: #{tpu_custom_call.1} parent=31 // pred_region
          %s480 = smul.u32 14, %s17
          %s482 = ssub.s32 896, 896
          %483 = vsyncadd %s473, %s482
          %s484 = smul.addr %s480, 64
          %s485 = scalar_lea.hbm %s3, %s484
          %s486 = sshll.u32 %s476, 4
          %s487 = int_to_ptr.vmem [resolvable:$true] %s486
          %492 = dma.vmem_to_hbm [thread:$0]  %s487, 896, %s485, %s473, 64, 64, 4
        $region36: #{tpu_custom_call.1} parent=31 // pred_fallthru
          _
      $region32: #{tpu_custom_call.1} parent=5 // pred_fallthru
        _
      %p493 = scmp.le.s32.totalorder 2, %s12
      // Predicated region
      $region37: #{tpu_custom_call.1} parent=5 // pred_check
        %p494 = pneg %p493
      $region38: #{tpu_custom_call.1} parent=5 // pred_check_branch
        %496 = sbr.rel (%p494) target = $region40
      $region39: #{tpu_custom_call.1} parent=5 // pred_region
        %s497 = ssub.s32 %s12, 2
        // Predicated region
        $region41: #{tpu_custom_call.1} parent=39 // pred_check
          %p498 = pneg %p109
        $region42: #{tpu_custom_call.1} parent=39 // pred_check_branch
          %500 = sbr.rel (%p498) target = $region44
        $region43: #{tpu_custom_call.1} parent=39 // pred_region
          %s501 = sand.u32 %s94, 1
          %s502 = scalar_lea.sflag [#allocation3], %s501
          %s503 = sand.u32 %s94, 1
          %s504 = smul.addr %s503, 56
          %s505 = scalar_lea.vmem [#allocation2], %s504
          %506 = dma.done %s502, 896
        $region44: #{tpu_custom_call.1} parent=39 // pred_fallthru
          _
      $region40: #{tpu_custom_call.1} parent=5 // pred_fallthru
        _
    $region6: #{tpu_custom_call.1} parent=1 // loop_footer
      %s16 = sadd.s32 1, %s12
    $region7: #{tpu_custom_call.1} parent=1 // loop_footer_branch
      %11 = sbr.rel target = $region3
    $region8: #{tpu_custom_call.1} parent=1 // loop_exit
      _
    %507 = vsyncpa [#allocation3], 1
    %s508 = scalar_lea.sflag [#allocation3], 1
    %509 = vsyncpa %s508, 1

</llo_original>
